<compile_context>
chip_gen: v5e
topology: v5e:2x2
jax: 0.10.0
libtpu: 0.0.40
codegen_flags: <defaults>
</compile_context>

<pallas_src>
import functools

import jax
import jax.numpy as jnp
import numpy as np
from jax import lax
from jax.experimental import pallas as pl
from jax.experimental.pallas import tpu as pltpu


def _round_up(n, m):
    return ((n + m - 1) // m) * m


def _pick_batch_tile(b, per_elem_bytes, max_bt=8, vmem_budget=40 * 2**20):
    """Largest divisor of b that fits the VMEM budget and keeps >= 2 grid steps."""
    best = 1
    for cand in range(1, min(b, max_bt) + 1):
        if b % cand != 0:
            continue
        if b > 1 and (b // cand) < 2:      # keep both v7x TensorCores busy
            continue
        if cand * per_elem_bytes > vmem_budget:
            continue
        best = cand
    return best


# ----------------------------------------------------------------------------
# Fused kernel: projection matmul + PA gate + LayerNorm, `bt` batches per step.
# ----------------------------------------------------------------------------
def _fused_kernel(cols_ref, w_ref, b_ref, dww_ref, dwb_ref, lnw_ref, lnb_ref,
                  o_ref, fpad_ref, *, bt, hp, wp, c_real):
    # cols_ref : (bt, hp*wp, Kp)   im2col patches (MXU dtype, K zero-padded)
    # w_ref    : (Kp, Cp)          projection weights (MXU dtype)
    # b_ref    : (1, Cp)           projection bias (f32)
    # dww_ref  : (9, 1, Cp)        depthwise 3x3 taps (f32)
    # dwb/lnw/lnb_ref : (1, Cp)    depthwise bias / LN weight / LN bias (f32)
    # o_ref    : (bt, hp*wp, Cp)   output block (channel-padded, f32)
    # fpad_ref : (bt, hp+2, wpad, Cp) VMEM halo scratch, wpad = roundup(wp+2, 8)
    cp = o_ref.shape[-1]
    mb = hp * wp
    wpad = fpad_ref.shape[2]

    # --- zero ONLY the 1-px halo border (interior is overwritten below) ------
    zrow = jnp.zeros((bt, 1, wpad, cp), jnp.float32)
    zcol = jnp.zeros((bt, hp, 1, cp), jnp.float32)
    fpad_ref[:, 0:1, :, :] = zrow
    fpad_ref[:, hp + 1:hp + 2, :, :] = zrow
    fpad_ref[:, 1:1 + hp, 0:1, :] = zcol
    fpad_ref[:, 1:1 + hp, wp + 1:wp + 2, :] = zcol

    # --- patch projection: one flattened im2col matmul on the MXU (+ bias) ---
    cols2d = cols_ref[...].reshape(bt * mb, cols_ref.shape[-1])
    feat = jnp.dot(cols2d, w_ref[...], preferred_element_type=jnp.float32)
    feat = feat + b_ref[...]                              # (bt*mb, cp) f32
    fpad_ref[:, 1:1 + hp, 1:1 + wp, :] = feat.reshape(bt, hp, wp, cp)

    # --- PA: depthwise 3x3 conv -> sigmoid gate -> multiply ------------------
    # The 9 taps are shifted slices read straight from the VMEM scratch ref.
    acc = fpad_ref[:, 0:hp, 0:wp, :] * dww_ref[0]
    for t in range(1, 9):
        dh, dw = divmod(t, 3)
        acc = acc + fpad_ref[:, dh:dh + hp, dw:dw + wp, :] * dww_ref[t]
    z = acc.reshape(bt * mb, cp) + dwb_ref[...]
    gate = 1.0 / (1.0 + jnp.exp(-z))                      # EUP exp, f32
    y = feat * gate                                       # feat reused from vregs

    # --- LayerNorm over the REAL channels only (eps=1e-6, biased variance) ---
    # Padded channel lanes of y are exactly zero (zero-padded proj weights and
    # bias -> feat == 0 there), so plain lane sums / c_real give the true mean;
    # the diff is masked so padded lanes do not pollute the variance.
    lane = lax.broadcasted_iota(jnp.int32, (1, cp), 1)
    mask = lane < c_real
    inv_c = 1.0 / c_real
    mean = jnp.sum(y, axis=-1, keepdims=True) * inv_c
    diff = jnp.where(mask, y - mean, 0.0)
    var = jnp.sum(diff * diff, axis=-1, keepdims=True) * inv_c
    out = diff * lax.rsqrt(var + 1e-6) * lnw_ref[...] + lnb_ref[...]

    # (bt*mb, cp) -> (bt, mb, cp): mb is a multiple of 8 here, so this split is
    # a free view and the output store is an unmasked, lane/sublane-dense vst.
    o_ref[...] = out.reshape(bt, mb, cp)


# ----------------------------------------------------------------------------
# im2col (wrapper side; ordering matches torch OIHW weight flattening)
# ----------------------------------------------------------------------------
def _im2col(x, k, stride, pad):
    # x: (B, C, H, W) -> (B, Ho*Wo, C*k*k)
    b, c, h, w = x.shape
    xp = jnp.pad(x, ((0, 0), (0, 0), (pad, pad), (pad, pad)))
    ho = (h + 2 * pad - k) // stride + 1
    wo = (w + 2 * pad - k) // stride + 1
    taps = []
    for ki in range(k):
        for kj in range(k):
            taps.append(
                xp[:, :, ki:ki + stride * ho:stride, kj:kj + stride * wo:stride]
            )  # (B, C, Ho, Wo)
    cols = jnp.stack(taps, axis=2)              # (B, C, k*k, Ho, Wo)
    cols = cols.transpose(0, 3, 4, 1, 2)        # (B, Ho, Wo, C, k*k)
    cols = cols.reshape(b, ho * wo, c * k * k)  # contraction idx = c*k*k+ki*k+kj
    return cols, ho, wo


@functools.partial(jax.jit, static_argnames=("patch_size", "mxu_dtype"))
def patch_embed_forward(x, params, *, patch_size, mxu_dtype=jnp.bfloat16):
    b, in_ch, h, w = x.shape
    out_ch = params["proj_w"].shape[0]
    k = patch_size + 1
    stride = patch_size
    pad = patch_size // 2

    cols, hp, wp = _im2col(x.astype(jnp.float32), k, stride, pad)  # (B, MB, Kr)
    mb = hp * wp
    k_real = in_ch * k * k
    k_pad = _round_up(k_real, 128)          # lane-dense contraction dim
    c_pad = _round_up(out_ch, 128)          # lane-dense channel dim
    wpad = _round_up(wp + 2, 8)             # sublane-dense halo scratch

    # ---- batch tile + VMEM budget (per perf review: size from real blocks) --
    mxu_bytes = jnp.dtype(mxu_dtype).itemsize
    per_elem = (2 * mb * k_pad * mxu_bytes        # double-buffered cols block
                + 2 * mb * c_pad * 4              # double-buffered output block
                + (hp + 2) * wpad * c_pad * 4)    # halo scratch
    bt = _pick_batch_tile(b, per_elem)
    param_bytes = 2 * (k_pad * c_pad * mxu_bytes + 14 * c_pad * 4)
    vmem_needed = bt * per_elem + param_bytes
    vmem_limit = int(min(48 * 2**20, max(4 * 2**20, 2 * vmem_needed)))

    cols = jnp.pad(cols, ((0, 0), (0, 0), (0, k_pad - k_real))).astype(mxu_dtype)

    # Zero-padded parameters: padded channels produce exactly-zero features,
    # so only the LayerNorm statistics need masking inside the kernel.
    w_mat = params["proj_w"].reshape(out_ch, k_real).T            # (Kr, C)
    w_mat = jnp.pad(w_mat, ((0, k_pad - k_real), (0, c_pad - out_ch)))
    w_mat = w_mat.astype(mxu_dtype)
    cpadding = ((0, 0), (0, c_pad - out_ch))
    b_row = jnp.pad(params["proj_b"].reshape(1, out_ch), cpadding)
    dww = jnp.pad(params["pa_w"].reshape(out_ch, 9).T, cpadding).reshape(9, 1, c_pad)
    dwb = jnp.pad(params["pa_b"].reshape(1, out_ch), cpadding)
    lnw = jnp.pad(params["ln_w"].reshape(1, out_ch), cpadding)
    lnb = jnp.pad(params["ln_b"].reshape(1, out_ch), cpadding)

    kernel = functools.partial(_fused_kernel, bt=bt, hp=hp, wp=wp, c_real=out_ch)

    out_padded = pl.pallas_call(
        kernel,
        out_shape=jax.ShapeDtypeStruct((b, mb, c_pad), jnp.float32),
        grid=(b // bt,),
        in_specs=[
            pl.BlockSpec((bt, mb, k_pad), lambda i: (i, 0, 0)),    # cols
            pl.BlockSpec((k_pad, c_pad), lambda i: (0, 0)),        # proj weight
            pl.BlockSpec((1, c_pad), lambda i: (0, 0)),            # proj bias
            pl.BlockSpec((9, 1, c_pad), lambda i: (0, 0, 0)),      # dw taps
            pl.BlockSpec((1, c_pad), lambda i: (0, 0)),            # dw bias
            pl.BlockSpec((1, c_pad), lambda i: (0, 0)),            # ln weight
            pl.BlockSpec((1, c_pad), lambda i: (0, 0)),            # ln bias
        ],
        out_specs=pl.BlockSpec((bt, mb, c_pad), lambda i: (i, 0, 0)),
        scratch_shapes=[pltpu.VMEM((bt, hp + 2, wpad, c_pad), jnp.float32)],
        compiler_params=pltpu.CompilerParams(
            dimension_semantics=("parallel",),
            vmem_limit_bytes=vmem_limit,
        ),
    )(cols, w_mat, b_row, dww, dwb, lnw, lnb)

    # flatten(2).transpose(1, 2) -> (B, Hp*Wp, C); drop the padded channels.
    return out_padded[:, :, :out_ch]


# ----------------------------------------------------------------------------
# Pure-JAX reference (for the correctness check)
# ----------------------------------------------------------------------------
def _ref_forward(x, params, patch_size):
    out_ch = params["proj_w"].shape[0]
    pad = patch_size // 2
    y = lax.conv_general_dilated(
        x, params["proj_w"], (patch_size, patch_size),
        [(pad, pad), (pad, pad)],
        dimension_numbers=("NCHW", "OIHW", "NCHW"),
        precision=lax.Precision.HIGHEST,
    ) + params["proj_b"][None, :, None, None]
    g = lax.conv_general_dilated(
        y, params["pa_w"], (1, 1), [(1, 1), (1, 1)],
        dimension_numbers=("NCHW", "OIHW", "NCHW"),
        feature_group_count=out_ch,
        precision=lax.Precision.HIGHEST,
    ) + params["pa_b"][None, :, None, None]
    y = y * jax.nn.sigmoid(g)
    b = y.shape[0]
    y = y.reshape(b, out_ch, -1).transpose(0, 2, 1)  # (B, Hp*Wp, C)
    mean = y.mean(-1, keepdims=True)
    var = ((y - mean) ** 2).mean(-1, keepdims=True)
    return (y - mean) / jnp.sqrt(var + 1e-6) * params["ln_w"] + params["ln_b"]


if __name__ == "__main__":
    # Small shapes consistent with the module.
    B, IN_CH, H, W = 2, 4, 16, 16
    OUT_CH, PATCH = 32, 4
    K = PATCH + 1

    ks = jax.random.split(jax.random.PRNGKey(0), 7)
    params = {
        "proj_w": 0.1 * jax.random.normal(ks[0], (OUT_CH, IN_CH, K, K), jnp.float32),
        "proj_b": 0.1 * jax.random.normal(ks[1], (OUT_CH,), jnp.float32),
        "pa_w": 0.1 * jax.random.normal(ks[2], (OUT_CH, 1, 3, 3), jnp.float32),
        "pa_b": 0.1 * jax.random.normal(ks[3], (OUT_CH,), jnp.float32),
        "ln_w": 1.0 + 0.05 * jax.random.normal(ks[4], (OUT_CH,), jnp.float32),
        "ln_b": 0.05 * jax.random.normal(ks[5], (OUT_CH,), jnp.float32),
    }
    x = jax.random.normal(ks[6], (B, IN_CH, H, W), jnp.float32)

    ref = _ref_forward(x, params, PATCH)

    # Default path: bf16 MXU inputs (v5e/v6e/v7x recommendation); all gate /
    # sigmoid / LayerNorm math stays f32 inside the kernel.
    out = patch_embed_forward(x, params, patch_size=PATCH)
    out = jax.block_until_ready(out)
    assert out.shape == (B, (H // PATCH) * (W // PATCH), OUT_CH), out.shape
    np.testing.assert_allclose(np.asarray(out), np.asarray(ref), atol=5e-2, rtol=5e-2)

    # f32 MXU path: tight numerical check against the f32 reference.
    out_f32 = patch_embed_forward(x, params, patch_size=PATCH,
                                  mxu_dtype=jnp.float32)
    out_f32 = jax.block_until_ready(out_f32)
    np.testing.assert_allclose(np.asarray(out_f32), np.asarray(ref),
                               atol=2e-4, rtol=2e-4)

    print("KERNEL_OK")
</pallas_src>

<mosaic_0001>
module attributes {stable_mosaic.version = 11 : i64} {
  func.func @_fused_kernel(%arg0: i32, %arg1: memref<1x16x128xbf16, #tpu.memory_space<vmem>>, %arg2: memref<128x128xbf16, #tpu.memory_space<vmem>>, %arg3: memref<1x128xf32, #tpu.memory_space<vmem>>, %arg4: memref<9x1x128xf32, #tpu.memory_space<vmem>>, %arg5: memref<1x128xf32, #tpu.memory_space<vmem>>, %arg6: memref<1x128xf32, #tpu.memory_space<vmem>>, %arg7: memref<1x128xf32, #tpu.memory_space<vmem>>, %arg8: memref<1x16x128xf32, #tpu.memory_space<vmem>>, %arg9: memref<1x6x8x128xf32, #tpu.memory_space<vmem>>) attributes {dimension_semantics = [#tpu.dimension_semantics<parallel>], iteration_bounds = array<i64: 2>, scalar_prefetch = 0 : i64, scratch_operands = 1 : i64, tpu.core_type = #tpu.core_type<tc>, window_params = [{transform_indices = @transform_0, window_bounds = array<i64: 1, 16, 128>}, {pipeline_mode = #tpu.pipeline_mode<synchronous>, transform_indices = @transform_1, window_bounds = array<i64: 128, 128>}, {pipeline_mode = #tpu.pipeline_mode<synchronous>, transform_indices = @transform_2, window_bounds = array<i64: 1, 128>}, {pipeline_mode = #tpu.pipeline_mode<synchronous>, transform_indices = @transform_3, window_bounds = array<i64: 9, 1, 128>}, {pipeline_mode = #tpu.pipeline_mode<synchronous>, transform_indices = @transform_4, window_bounds = array<i64: 1, 128>}, {pipeline_mode = #tpu.pipeline_mode<synchronous>, transform_indices = @transform_5, window_bounds = array<i64: 1, 128>}, {pipeline_mode = #tpu.pipeline_mode<synchronous>, transform_indices = @transform_6, window_bounds = array<i64: 1, 128>}, {transform_indices = @transform_7, window_bounds = array<i64: 1, 16, 128>}]} {
    %cst = arith.constant 0.000000e+00 : f32
    %0 = vector.broadcast %cst : f32 to vector<1x1x8x128xf32>
    %cst_0 = arith.constant 0.000000e+00 : f32
    %1 = vector.broadcast %cst_0 : f32 to vector<1x4x1x128xf32>
    %c0 = arith.constant 0 : index
    %c0_1 = arith.constant 0 : index
    %c0_2 = arith.constant 0 : index
    %c0_3 = arith.constant 0 : index
    %2 = vector.load %arg9[%c0, %c0_1, %c0_2, %c0_3] : memref<1x6x8x128xf32, #tpu.memory_space<vmem>>, vector<1x1x8x128xf32>
    tpu.vector_store %arg9[%c0, %c0_1, %c0_2, %c0_3], %0 {strides = array<i32>} : memref<1x6x8x128xf32, #tpu.memory_space<vmem>>, vector<1x1x8x128xf32>,
    %c0_4 = arith.constant 0 : index
    %c5 = arith.constant 5 : index
    %c0_5 = arith.constant 0 : index
    %c0_6 = arith.constant 0 : index
    %3 = vector.load %arg9[%c0_4, %c5, %c0_5, %c0_6] : memref<1x6x8x128xf32, #tpu.memory_space<vmem>>, vector<1x1x8x128xf32>
    tpu.vector_store %arg9[%c0_4, %c5, %c0_5, %c0_6], %0 {strides = array<i32>} : memref<1x6x8x128xf32, #tpu.memory_space<vmem>>, vector<1x1x8x128xf32>,
    %c0_7 = arith.constant 0 : index
    %c1 = arith.constant 1 : index
    %c0_8 = arith.constant 0 : index
    %c0_9 = arith.constant 0 : index
    %4 = vector.load %arg9[%c0_7, %c1, %c0_8, %c0_9] : memref<1x6x8x128xf32, #tpu.memory_space<vmem>>, vector<1x4x1x128xf32>
    tpu.vector_store %arg9[%c0_7, %c1, %c0_8, %c0_9], %1 {strides = array<i32>} : memref<1x6x8x128xf32, #tpu.memory_space<vmem>>, vector<1x4x1x128xf32>,
    %c0_10 = arith.constant 0 : index
    %c1_11 = arith.constant 1 : index
    %c5_12 = arith.constant 5 : index
    %c0_13 = arith.constant 0 : index
    %5 = vector.load %arg9[%c0_10, %c1_11, %c5_12, %c0_13] : memref<1x6x8x128xf32, #tpu.memory_space<vmem>>, vector<1x4x1x128xf32>
    tpu.vector_store %arg9[%c0_10, %c1_11, %c5_12, %c0_13], %1 {strides = array<i32>} : memref<1x6x8x128xf32, #tpu.memory_space<vmem>>, vector<1x4x1x128xf32>,
    %c0_14 = arith.constant 0 : index
    %c0_15 = arith.constant 0 : index
    %c0_16 = arith.constant 0 : index
    %6 = vector.load %arg1[%c0_14, %c0_15, %c0_16] : memref<1x16x128xbf16, #tpu.memory_space<vmem>>, vector<1x16x128xbf16>
    %7 = vector.shape_cast %6 : vector<1x16x128xbf16> to vector<16x128xbf16>
    %c0_17 = arith.constant 0 : index
    %c0_18 = arith.constant 0 : index
    %8 = vector.load %arg2[%c0_17, %c0_18] : memref<128x128xbf16, #tpu.memory_space<vmem>>, vector<128x128xbf16>
    %cst_19 = arith.constant dense<0.000000e+00> : vector<16x128xf32>
    %9 = tpu.matmul %7, %8, %cst_19 {dimension_numbers = #tpu.dot_dimension_numbers<[1], [0], [0], [1], [0, 0, 1, 1], [], []>} : vector<16x128xbf16>, vector<128x128xbf16>, vector<16x128xf32> -> vector<16x128xf32>
    %c0_20 = arith.constant 0 : index
    %c0_21 = arith.constant 0 : index
    %10 = vector.load %arg3[%c0_20, %c0_21] : memref<1x128xf32, #tpu.memory_space<vmem>>, vector<1x128xf32>
    %11 = vector.broadcast %10 : vector<1x128xf32> to vector<16x128xf32>
    %12 = arith.addf %9, %11 : vector<16x128xf32>
    %13 = vector.shape_cast %12 : vector<16x128xf32> to vector<1x4x4x128xf32>
    %c0_22 = arith.constant 0 : index
    %c1_23 = arith.constant 1 : index
    %c1_24 = arith.constant 1 : index
    %c0_25 = arith.constant 0 : index
    %14 = vector.load %arg9[%c0_22, %c1_23, %c1_24, %c0_25] : memref<1x6x8x128xf32, #tpu.memory_space<vmem>>, vector<1x4x4x128xf32>
    tpu.vector_store %arg9[%c0_22, %c1_23, %c1_24, %c0_25], %13 {strides = array<i32>} : memref<1x6x8x128xf32, #tpu.memory_space<vmem>>, vector<1x4x4x128xf32>,
    %c0_26 = arith.constant 0 : index
    %c0_27 = arith.constant 0 : index
    %c0_28 = arith.constant 0 : index
    %c0_29 = arith.constant 0 : index
    %15 = vector.load %arg9[%c0_26, %c0_27, %c0_28, %c0_29] : memref<1x6x8x128xf32, #tpu.memory_space<vmem>>, vector<1x4x4x128xf32>
    %c0_30 = arith.constant 0 : index
    %c0_31 = arith.constant 0 : index
    %c0_32 = arith.constant 0 : index
    %16 = vector.load %arg4[%c0_30, %c0_31, %c0_32] : memref<9x1x128xf32, #tpu.memory_space<vmem>>, vector<1x1x128xf32>
    %17 = vector.shape_cast %16 : vector<1x1x128xf32> to vector<1x128xf32>
    %18 = vector.shape_cast %17 : vector<1x128xf32> to vector<1x1x1x128xf32>
    %19 = vector.broadcast %18 : vector<1x1x1x128xf32> to vector<1x4x4x128xf32>
    %20 = arith.mulf %15, %19 : vector<1x4x4x128xf32>
    %c0_33 = arith.constant 0 : index
    %c0_34 = arith.constant 0 : index
    %c1_35 = arith.constant 1 : index
    %c0_36 = arith.constant 0 : index
    %21 = vector.load %arg9[%c0_33, %c0_34, %c1_35, %c0_36] : memref<1x6x8x128xf32, #tpu.memory_space<vmem>>, vector<1x4x4x128xf32>
    %c1_37 = arith.constant 1 : index
    %c0_38 = arith.constant 0 : index
    %c0_39 = arith.constant 0 : index
    %22 = vector.load %arg4[%c1_37, %c0_38, %c0_39] : memref<9x1x128xf32, #tpu.memory_space<vmem>>, vector<1x1x128xf32>
    %23 = vector.shape_cast %22 : vector<1x1x128xf32> to vector<1x128xf32>
    %24 = vector.shape_cast %23 : vector<1x128xf32> to vector<1x1x1x128xf32>
    %25 = vector.broadcast %24 : vector<1x1x1x128xf32> to vector<1x4x4x128xf32>
    %26 = arith.mulf %21, %25 : vector<1x4x4x128xf32>
    %27 = arith.addf %20, %26 : vector<1x4x4x128xf32>
    %c0_40 = arith.constant 0 : index
    %c0_41 = arith.constant 0 : index
    %c2 = arith.constant 2 : index
    %c0_42 = arith.constant 0 : index
    %28 = vector.load %arg9[%c0_40, %c0_41, %c2, %c0_42] : memref<1x6x8x128xf32, #tpu.memory_space<vmem>>, vector<1x4x4x128xf32>
    %c2_43 = arith.constant 2 : index
    %c0_44 = arith.constant 0 : index
    %c0_45 = arith.constant 0 : index
    %29 = vector.load %arg4[%c2_43, %c0_44, %c0_45] : memref<9x1x128xf32, #tpu.memory_space<vmem>>, vector<1x1x128xf32>
    %30 = vector.shape_cast %29 : vector<1x1x128xf32> to vector<1x128xf32>
    %31 = vector.shape_cast %30 : vector<1x128xf32> to vector<1x1x1x128xf32>
    %32 = vector.broadcast %31 : vector<1x1x1x128xf32> to vector<1x4x4x128xf32>
    %33 = arith.mulf %28, %32 : vector<1x4x4x128xf32>
    %34 = arith.addf %27, %33 : vector<1x4x4x128xf32>
    %c0_46 = arith.constant 0 : index
    %c1_47 = arith.constant 1 : index
    %c0_48 = arith.constant 0 : index
    %c0_49 = arith.constant 0 : index
    %35 = vector.load %arg9[%c0_46, %c1_47, %c0_48, %c0_49] : memref<1x6x8x128xf32, #tpu.memory_space<vmem>>, vector<1x4x4x128xf32>
    %c3 = arith.constant 3 : index
    %c0_50 = arith.constant 0 : index
    %c0_51 = arith.constant 0 : index
    %36 = vector.load %arg4[%c3, %c0_50, %c0_51] : memref<9x1x128xf32, #tpu.memory_space<vmem>>, vector<1x1x128xf32>
    %37 = vector.shape_cast %36 : vector<1x1x128xf32> to vector<1x128xf32>
    %38 = vector.shape_cast %37 : vector<1x128xf32> to vector<1x1x1x128xf32>
    %39 = vector.broadcast %38 : vector<1x1x1x128xf32> to vector<1x4x4x128xf32>
    %40 = arith.mulf %35, %39 : vector<1x4x4x128xf32>
    %41 = arith.addf %34, %40 : vector<1x4x4x128xf32>
    %c0_52 = arith.constant 0 : index
    %c1_53 = arith.constant 1 : index
    %c1_54 = arith.constant 1 : index
    %c0_55 = arith.constant 0 : index
    %42 = vector.load %arg9[%c0_52, %c1_53, %c1_54, %c0_55] : memref<1x6x8x128xf32, #tpu.memory_space<vmem>>, vector<1x4x4x128xf32>
    %c4 = arith.constant 4 : index
    %c0_56 = arith.constant 0 : index
    %c0_57 = arith.constant 0 : index
    %43 = vector.load %arg4[%c4, %c0_56, %c0_57] : memref<9x1x128xf32, #tpu.memory_space<vmem>>, vector<1x1x128xf32>
    %44 = vector.shape_cast %43 : vector<1x1x128xf32> to vector<1x128xf32>
    %45 = vector.shape_cast %44 : vector<1x128xf32> to vector<1x1x1x128xf32>
    %46 = vector.broadcast %45 : vector<1x1x1x128xf32> to vector<1x4x4x128xf32>
    %47 = arith.mulf %42, %46 : vector<1x4x4x128xf32>
    %48 = arith.addf %41, %47 : vector<1x4x4x128xf32>
    %c0_58 = arith.constant 0 : index
    %c1_59 = arith.constant 1 : index
    %c2_60 = arith.constant 2 : index
    %c0_61 = arith.constant 0 : index
    %49 = vector.load %arg9[%c0_58, %c1_59, %c2_60, %c0_61] : memref<1x6x8x128xf32, #tpu.memory_space<vmem>>, vector<1x4x4x128xf32>
    %c5_62 = arith.constant 5 : index
    %c0_63 = arith.constant 0 : index
    %c0_64 = arith.constant 0 : index
    %50 = vector.load %arg4[%c5_62, %c0_63, %c0_64] : memref<9x1x128xf32, #tpu.memory_space<vmem>>, vector<1x1x128xf32>
    %51 = vector.shape_cast %50 : vector<1x1x128xf32> to vector<1x128xf32>
    %52 = vector.shape_cast %51 : vector<1x128xf32> to vector<1x1x1x128xf32>
    %53 = vector.broadcast %52 : vector<1x1x1x128xf32> to vector<1x4x4x128xf32>
    %54 = arith.mulf %49, %53 : vector<1x4x4x128xf32>
    %55 = arith.addf %48, %54 : vector<1x4x4x128xf32>
    %c0_65 = arith.constant 0 : index
    %c2_66 = arith.constant 2 : index
    %c0_67 = arith.constant 0 : index
    %c0_68 = arith.constant 0 : index
    %56 = vector.load %arg9[%c0_65, %c2_66, %c0_67, %c0_68] : memref<1x6x8x128xf32, #tpu.memory_space<vmem>>, vector<1x4x4x128xf32>
    %c6 = arith.constant 6 : index
    %c0_69 = arith.constant 0 : index
    %c0_70 = arith.constant 0 : index
    %57 = vector.load %arg4[%c6, %c0_69, %c0_70] : memref<9x1x128xf32, #tpu.memory_space<vmem>>, vector<1x1x128xf32>
    %58 = vector.shape_cast %57 : vector<1x1x128xf32> to vector<1x128xf32>
    %59 = vector.shape_cast %58 : vector<1x128xf32> to vector<1x1x1x128xf32>
    %60 = vector.broadcast %59 : vector<1x1x1x128xf32> to vector<1x4x4x128xf32>
    %61 = arith.mulf %56, %60 : vector<1x4x4x128xf32>
    %62 = arith.addf %55, %61 : vector<1x4x4x128xf32>
    %c0_71 = arith.constant 0 : index
    %c2_72 = arith.constant 2 : index
    %c1_73 = arith.constant 1 : index
    %c0_74 = arith.constant 0 : index
    %63 = vector.load %arg9[%c0_71, %c2_72, %c1_73, %c0_74] : memref<1x6x8x128xf32, #tpu.memory_space<vmem>>, vector<1x4x4x128xf32>
    %c7 = arith.constant 7 : index
    %c0_75 = arith.constant 0 : index
    %c0_76 = arith.constant 0 : index
    %64 = vector.load %arg4[%c7, %c0_75, %c0_76] : memref<9x1x128xf32, #tpu.memory_space<vmem>>, vector<1x1x128xf32>
    %65 = vector.shape_cast %64 : vector<1x1x128xf32> to vector<1x128xf32>
    %66 = vector.shape_cast %65 : vector<1x128xf32> to vector<1x1x1x128xf32>
    %67 = vector.broadcast %66 : vector<1x1x1x128xf32> to vector<1x4x4x128xf32>
    %68 = arith.mulf %63, %67 : vector<1x4x4x128xf32>
    %69 = arith.addf %62, %68 : vector<1x4x4x128xf32>
    %c0_77 = arith.constant 0 : index
    %c2_78 = arith.constant 2 : index
    %c2_79 = arith.constant 2 : index
    %c0_80 = arith.constant 0 : index
    %70 = vector.load %arg9[%c0_77, %c2_78, %c2_79, %c0_80] : memref<1x6x8x128xf32, #tpu.memory_space<vmem>>, vector<1x4x4x128xf32>
    %c8 = arith.constant 8 : index
    %c0_81 = arith.constant 0 : index
    %c0_82 = arith.constant 0 : index
    %71 = vector.load %arg4[%c8, %c0_81, %c0_82] : memref<9x1x128xf32, #tpu.memory_space<vmem>>, vector<1x1x128xf32>
    %72 = vector.shape_cast %71 : vector<1x1x128xf32> to vector<1x128xf32>
    %73 = vector.shape_cast %72 : vector<1x128xf32> to vector<1x1x1x128xf32>
    %74 = vector.broadcast %73 : vector<1x1x1x128xf32> to vector<1x4x4x128xf32>
    %75 = arith.mulf %70, %74 : vector<1x4x4x128xf32>
    %76 = arith.addf %69, %75 : vector<1x4x4x128xf32>
    %77 = vector.shape_cast %76 : vector<1x4x4x128xf32> to vector<16x128xf32>
    %c0_83 = arith.constant 0 : index
    %c0_84 = arith.constant 0 : index
    %78 = vector.load %arg5[%c0_83, %c0_84] : memref<1x128xf32, #tpu.memory_space<vmem>>, vector<1x128xf32>
    %79 = vector.broadcast %78 : vector<1x128xf32> to vector<16x128xf32>
    %80 = arith.addf %77, %79 : vector<16x128xf32>
    %cst_85 = arith.constant 0.000000e+00 : f32
    %81 = vector.broadcast %cst_85 : f32 to vector<16x128xf32>
    %82 = arith.subf %81, %80 : vector<16x128xf32>
    %83 = math.exp %82 : vector<16x128xf32>
    %cst_86 = arith.constant 1.000000e+00 : f32
    %84 = vector.broadcast %cst_86 : f32 to vector<16x128xf32>
    %85 = arith.addf %84, %83 : vector<16x128xf32>
    %cst_87 = arith.constant 1.000000e+00 : f32
    %86 = vector.broadcast %cst_87 : f32 to vector<16x128xf32>
    %87 = arith.divf %86, %85 : vector<16x128xf32>
    %88 = arith.mulf %12, %87 : vector<16x128xf32>
    %89 = tpu.iota {dimensions = array<i32: 1>} : vector<1x128xi32>
    %c32_i32 = arith.constant 32 : i32
    %90 = vector.broadcast %c32_i32 : i32 to vector<1x128xi32>
    %91 = arith.cmpi slt, %89, %90 : vector<1x128xi32>
    %cst_88 = arith.constant dense<0.000000e+00> : vector<16xf32>
    %92 = vector.multi_reduction <add>, %88, %cst_88 [1] : vector<16x128xf32> to vector<16xf32>
    %93 = vector.shape_cast %92 : vector<16xf32> to vector<16x1xf32>
    %cst_89 = arith.constant 3.125000e-02 : f32
    %94 = vector.broadcast %cst_89 : f32 to vector<16x1xf32>
    %95 = arith.mulf %93, %94 : vector<16x1xf32>
    %96 = vector.broadcast %95 : vector<16x1xf32> to vector<16x128xf32>
    %97 = arith.subf %88, %96 : vector<16x128xf32>
    %cst_90 = arith.constant 0.000000e+00 : f32
    %98 = vector.shape_cast %91 : vector<1x128xi1> to vector<1x128xi1>
    %99 = vector.broadcast %98 : vector<1x128xi1> to vector<16x128xi1>
    %100 = vector.broadcast %cst_90 : f32 to vector<16x128xf32>
    %101 = arith.select %99, %97, %100 : vector<16x128xi1>, vector<16x128xf32>
    %102 = arith.mulf %101, %101 : vector<16x128xf32>
    %cst_91 = arith.constant dense<0.000000e+00> : vector<16xf32>
    %103 = vector.multi_reduction <add>, %102, %cst_91 [1] : vector<16x128xf32> to vector<16xf32>
    %104 = vector.shape_cast %103 : vector<16xf32> to vector<16x1xf32>
    %cst_92 = arith.constant 3.125000e-02 : f32
    %105 = vector.broadcast %cst_92 : f32 to vector<16x1xf32>
    %106 = arith.mulf %104, %105 : vector<16x1xf32>
    %cst_93 = arith.constant 9.99999997E-7 : f32
    %107 = vector.broadcast %cst_93 : f32 to vector<16x1xf32>
    %108 = arith.addf %106, %107 : vector<16x1xf32>
    %109 = math.rsqrt %108 : vector<16x1xf32>
    %110 = vector.broadcast %109 : vector<16x1xf32> to vector<16x128xf32>
    %111 = arith.mulf %101, %110 : vector<16x128xf32>
    %c0_94 = arith.constant 0 : index
    %c0_95 = arith.constant 0 : index
    %112 = vector.load %arg6[%c0_94, %c0_95] : memref<1x128xf32, #tpu.memory_space<vmem>>, vector<1x128xf32>
    %113 = vector.broadcast %112 : vector<1x128xf32> to vector<16x128xf32>
    %114 = arith.mulf %111, %113 : vector<16x128xf32>
    %c0_96 = arith.constant 0 : index
    %c0_97 = arith.constant 0 : index
    %115 = vector.load %arg7[%c0_96, %c0_97] : memref<1x128xf32, #tpu.memory_space<vmem>>, vector<1x128xf32>
    %116 = vector.broadcast %115 : vector<1x128xf32> to vector<16x128xf32>
    %117 = arith.addf %114, %116 : vector<16x128xf32>
    %118 = vector.shape_cast %117 : vector<16x128xf32> to vector<1x16x128xf32>
    %c0_98 = arith.constant 0 : index
    %c0_99 = arith.constant 0 : index
    %c0_100 = arith.constant 0 : index
    %119 = vector.load %arg8[%c0_98, %c0_99, %c0_100] : memref<1x16x128xf32, #tpu.memory_space<vmem>>, vector<1x16x128xf32>
    tpu.vector_store %arg8[%c0_98, %c0_99, %c0_100], %118 {strides = array<i32>} : memref<1x16x128xf32, #tpu.memory_space<vmem>>, vector<1x16x128xf32>,
    return
  }
  func.func @transform_0(%arg0: i32) -> (i32, i32, i32) {
    %c0_i32 = arith.constant 0 : i32
    %c0_i32_0 = arith.constant 0 : i32
    %c0_i32_1 = arith.constant 0 : i32
    return %arg0, %c0_i32, %c0_i32_0 : i32, i32, i32
  }
  func.func @transform_1(%arg0: i32) -> (i32, i32) {
    %c0_i32 = arith.constant 0 : i32
    %c0_i32_0 = arith.constant 0 : i32
    %c0_i32_1 = arith.constant 0 : i32
    return %c0_i32, %c0_i32_0 : i32, i32
  }
  func.func @transform_2(%arg0: i32) -> (i32, i32) {
    %c0_i32 = arith.constant 0 : i32
    %c0_i32_0 = arith.constant 0 : i32
    %c0_i32_1 = arith.constant 0 : i32
    return %c0_i32, %c0_i32_0 : i32, i32
  }
  func.func @transform_3(%arg0: i32) -> (i32, i32, i32) {
    %c0_i32 = arith.constant 0 : i32
    %c0_i32_0 = arith.constant 0 : i32
    %c0_i32_1 = arith.constant 0 : i32
    %c0_i32_2 = arith.constant 0 : i32
    return %c0_i32, %c0_i32_0, %c0_i32_1 : i32, i32, i32
  }
  func.func @transform_4(%arg0: i32) -> (i32, i32) {
    %c0_i32 = arith.constant 0 : i32
    %c0_i32_0 = arith.constant 0 : i32
    %c0_i32_1 = arith.constant 0 : i32
    return %c0_i32, %c0_i32_0 : i32, i32
  }
  func.func @transform_5(%arg0: i32) -> (i32, i32) {
    %c0_i32 = arith.constant 0 : i32
    %c0_i32_0 = arith.constant 0 : i32
    %c0_i32_1 = arith.constant 0 : i32
    return %c0_i32, %c0_i32_0 : i32, i32
  }
  func.func @transform_6(%arg0: i32) -> (i32, i32) {
    %c0_i32 = arith.constant 0 : i32
    %c0_i32_0 = arith.constant 0 : i32
    %c0_i32_1 = arith.constant 0 : i32
    return %c0_i32, %c0_i32_0 : i32, i32
  }
  func.func @transform_7(%arg0: i32) -> (i32, i32, i32) {
    %c0_i32 = arith.constant 0 : i32
    %c0_i32_0 = arith.constant 0 : i32
    %c0_i32_1 = arith.constant 0 : i32
    return %arg0, %c0_i32, %c0_i32_0 : i32, i32, i32
  }
}

</mosaic_0001>

<llo_original>
// kernel: patch_embed_forward.1
$region0: #{patch_embed_forward.1}
  #allocation0 [shape = 'u32[]', space=smem, size = 0x4, offset = 0x4, fixed_abs, tag = 'smem constant byte address 0x4 - core index']
  #allocation1 [shape = 'u32[72,128]{1,0:T(1,128)}', space=vmem, size = 0x9000, scoped, tag = 'internal scratch']
  #allocation2 [shape = 'f32[1,6,8,128]{3,2,1,0:T(8,128)}', space=vmem, size = 0x6000, scoped, tag = 'scratch operand']
  %s0 = inlined_call_operand.vmem [shape: bf16[2,16,128], index: 0, kind: input, shape index: {}]
  %s1 = inlined_call_operand.vmem [shape: bf16[128,128], index: 1, kind: input, shape index: {}]
  %s2 = inlined_call_operand.vmem [shape: f32[1,128], index: 2, kind: input, shape index: {}]
  %s3 = inlined_call_operand.vmem [shape: f32[9,1,128], index: 3, kind: input, shape index: {}]
  %s4 = inlined_call_operand.vmem [shape: f32[1,128], index: 4, kind: input, shape index: {}]
  %s5 = inlined_call_operand.vmem [shape: f32[1,128], index: 5, kind: input, shape index: {}]
  %s6 = inlined_call_operand.vmem [shape: f32[1,128], index: 6, kind: input, shape index: {}]
  %s7 = inlined_call_operand.hbm [shape: f32[2,16,128], index: 7, kind: output, shape index: {}]
  %s8 = sld [smem:[#allocation0]]
  $region61: #{patch_embed_forward.1} parent=0
    _
  %s10 = ssub.s32 1, %s8
  %s11 = scalar_select 0, %s10, %s8
  $region1: #{patch_embed_forward.1} parent=0
    #allocation3 [shape = 'u8[16384]{0}', space=vmem, size = 0x4000, scoped, tag = 'output window, operand 0']
    #allocation4 [shape = 's32[2]{0}', space=sflag, size = 0x8, scoped, tag = 'scoped memory for patch_embed_forward.1']
    %12 = vsyncpa [#allocation4], 0
    %s13 = scalar_lea.sflag [#allocation4], 1
    %14 = vsyncpa %s13, 0
    loop: start=0, step=1, limit=4
    $region2: #{patch_embed_forward.1} parent=1 // loop_pre_header
      _
    $region3: #{patch_embed_forward.1} parent=1 // loop_header
      %s16 = sphi 0, %s20
      %p17 = scmp.ge.s32.totalorder %s16, 4
      %s26 = sphi 0, %s28
      %s29 = sphi 0, %s26
      %s30 = sphi 0, %s29
      %s46 = sphi 0, %s30
      %s50 = sphi 0, %s50
      %s52 = sphi 0, %s50
      %s53 = sphi 0, %s52
      %s67 = sphi 0, %s53
      %s71 = sphi 0, %s71
      %s73 = sphi 0, %s71
      %s74 = sphi 0, %s73
      %s88 = sphi 0, %s74
      %s92 = sphi 0, %s92
      %s94 = sphi 0, %s92
      %s95 = sphi 0, %s94
      %s109 = sphi 0, %s95
      %s113 = sphi 0, %s113
      %s115 = sphi 0, %s113
      %s116 = sphi 0, %s115
      %s130 = sphi 0, %s116
      %s134 = sphi 0, %s134
      %s136 = sphi 0, %s134
      %s137 = sphi 0, %s136
      %s151 = sphi 0, %s137
      %s155 = sphi 0, %s155
      %s157 = sphi 0, %s155
      %s158 = sphi 0, %s157
      %s172 = sphi 0, %s158
      %s178 = sphi 0, %s180
      %s181 = sphi 0, %s178
      %s182 = sphi 0, %s181
      %s198 = sphi 0, %s182
    $region4: #{patch_embed_forward.1} parent=1 // loop_header_branch
      %19 = sbr.rel (%p17) target = $region8
    $region5: #{patch_embed_forward.1} parent=1 // loop_body
      %s21 = ssub.s32 %s16, 1
      %s22 = ssub.s32 %s16, 2
      %s23 = sadd.s32 %s16, 1
      %s24 = ssub.s32 %s16, %s23
      %p25 = scmp.eq.s32.totalorder %s24, 0
      %s27 = sadd.s32 %s26, 1
      %s28 = scalar_select %p25, %s26, %s27
      %p31 = pneg %p25
      %p32 = scmp.eq.s32.totalorder %s16, 1
      %p33 = por %p31, %p32
      %p34 = scmp.ne.s32.totalorder %s26, %s29
      %p35 = scmp.eq.s32.totalorder %s16, 0
      %p36 = por %p34, %p35
      %p37 = scmp.ne.s32.totalorder %s26, %s29
      %p38 = scmp.eq.s32.totalorder %s21, 1
      %p39 = por %p37, %p38
      %p40 = scmp.ne.s32.totalorder %s29, %s30
      %p41 = scmp.eq.s32.totalorder %s21, 0
      %p42 = por %p40, %p41
      %p43 = scmp.ne.s32.totalorder %s29, %s30
      %p44 = scmp.eq.s32.totalorder %s22, 1
      %p45 = por %p43, %p44
      %p47 = scmp.ne.s32.totalorder %s30, %s46
      %p48 = scmp.eq.s32.totalorder %s22, 0
      %p49 = por %p47, %p48
      %s51 = sadd.s32 %s50, 1
      %p54 = scmp.eq.s32.totalorder %s16, 1
      %p55 = scmp.ne.s32.totalorder %s50, %s52
      %p56 = scmp.eq.s32.totalorder %s16, 0
      %p57 = por %p55, %p56
      %p58 = scmp.ne.s32.totalorder %s50, %s52
      %p59 = scmp.eq.s32.totalorder %s21, 1
      %p60 = por %p58, %p59
      %p61 = scmp.ne.s32.totalorder %s52, %s53
      %p62 = scmp.eq.s32.totalorder %s21, 0
      %p63 = por %p61, %p62
      %p64 = scmp.ne.s32.totalorder %s52, %s53
      %p65 = scmp.eq.s32.totalorder %s22, 1
      %p66 = por %p64, %p65
      %p68 = scmp.ne.s32.totalorder %s53, %s67
      %p69 = scmp.eq.s32.totalorder %s22, 0
      %p70 = por %p68, %p69
      %s72 = sadd.s32 %s71, 1
      %p75 = scmp.eq.s32.totalorder %s16, 1
      %p76 = scmp.ne.s32.totalorder %s71, %s73
      %p77 = scmp.eq.s32.totalorder %s16, 0
      %p78 = por %p76, %p77
      %p79 = scmp.ne.s32.totalorder %s71, %s73
      %p80 = scmp.eq.s32.totalorder %s21, 1
      %p81 = por %p79, %p80
      %p82 = scmp.ne.s32.totalorder %s73, %s74
      %p83 = scmp.eq.s32.totalorder %s21, 0
      %p84 = por %p82, %p83
      %p85 = scmp.ne.s32.totalorder %s73, %s74
      %p86 = scmp.eq.s32.totalorder %s22, 1
      %p87 = por %p85, %p86
      %p89 = scmp.ne.s32.totalorder %s74, %s88
      %p90 = scmp.eq.s32.totalorder %s22, 0
      %p91 = por %p89, %p90
      %s93 = sadd.s32 %s92, 1
      %p96 = scmp.eq.s32.totalorder %s16, 1
      %p97 = scmp.ne.s32.totalorder %s92, %s94
      %p98 = scmp.eq.s32.totalorder %s16, 0
      %p99 = por %p97, %p98
      %p100 = scmp.ne.s32.totalorder %s92, %s94
      %p101 = scmp.eq.s32.totalorder %s21, 1
      %p102 = por %p100, %p101
      %p103 = scmp.ne.s32.totalorder %s94, %s95
      %p104 = scmp.eq.s32.totalorder %s21, 0
      %p105 = por %p103, %p104
      %p106 = scmp.ne.s32.totalorder %s94, %s95
      %p107 = scmp.eq.s32.totalorder %s22, 1
      %p108 = por %p106, %p107
      %p110 = scmp.ne.s32.totalorder %s95, %s109
      %p111 = scmp.eq.s32.totalorder %s22, 0
      %p112 = por %p110, %p111
      %s114 = sadd.s32 %s113, 1
      %p117 = scmp.eq.s32.totalorder %s16, 1
      %p118 = scmp.ne.s32.totalorder %s113, %s115
      %p119 = scmp.eq.s32.totalorder %s16, 0
      %p120 = por %p118, %p119
      %p121 = scmp.ne.s32.totalorder %s113, %s115
      %p122 = scmp.eq.s32.totalorder %s21, 1
      %p123 = por %p121, %p122
      %p124 = scmp.ne.s32.totalorder %s115, %s116
      %p125 = scmp.eq.s32.totalorder %s21, 0
      %p126 = por %p124, %p125
      %p127 = scmp.ne.s32.totalorder %s115, %s116
      %p128 = scmp.eq.s32.totalorder %s22, 1
      %p129 = por %p127, %p128
      %p131 = scmp.ne.s32.totalorder %s116, %s130
      %p132 = scmp.eq.s32.totalorder %s22, 0
      %p133 = por %p131, %p132
      %s135 = sadd.s32 %s134, 1
      %p138 = scmp.eq.s32.totalorder %s16, 1
      %p139 = scmp.ne.s32.totalorder %s134, %s136
      %p140 = scmp.eq.s32.totalorder %s16, 0
      %p141 = por %p139, %p140
      %p142 = scmp.ne.s32.totalorder %s134, %s136
      %p143 = scmp.eq.s32.totalorder %s21, 1
      %p144 = por %p142, %p143
      %p145 = scmp.ne.s32.totalorder %s136, %s137
      %p146 = scmp.eq.s32.totalorder %s21, 0
      %p147 = por %p145, %p146
      %p148 = scmp.ne.s32.totalorder %s136, %s137
      %p149 = scmp.eq.s32.totalorder %s22, 1
      %p150 = por %p148, %p149
      %p152 = scmp.ne.s32.totalorder %s137, %s151
      %p153 = scmp.eq.s32.totalorder %s22, 0
      %p154 = por %p152, %p153
      %s156 = sadd.s32 %s155, 1
      %p159 = scmp.eq.s32.totalorder %s16, 1
      %p160 = scmp.ne.s32.totalorder %s155, %s157
      %p161 = scmp.eq.s32.totalorder %s16, 0
      %p162 = por %p160, %p161
      %p163 = scmp.ne.s32.totalorder %s155, %s157
      %p164 = scmp.eq.s32.totalorder %s21, 1
      %p165 = por %p163, %p164
      %p166 = scmp.ne.s32.totalorder %s157, %s158
      %p167 = scmp.eq.s32.totalorder %s21, 0
      %p168 = por %p166, %p167
      %p169 = scmp.ne.s32.totalorder %s157, %s158
      %p170 = scmp.eq.s32.totalorder %s22, 1
      %p171 = por %p169, %p170
      %p173 = scmp.ne.s32.totalorder %s158, %s172
      %p174 = scmp.eq.s32.totalorder %s22, 0
      %p175 = por %p173, %p174
      %s176 = ssub.s32 %s16, %s23
      %p177 = scmp.eq.s32.totalorder %s176, 0
      %s179 = sadd.s32 %s178, 1
      %s180 = scalar_select %p177, %s178, %s179
      %p183 = pneg %p177
      %p184 = scmp.eq.s32.totalorder %s16, 1
      %p185 = por %p183, %p184
      %p186 = scmp.ne.s32.totalorder %s178, %s181
      %p187 = scmp.eq.s32.totalorder %s16, 0
      %p188 = por %p186, %p187
      %p189 = scmp.ne.s32.totalorder %s178, %s181
      %p190 = scmp.eq.s32.totalorder %s21, 1
      %p191 = por %p189, %p190
      %p192 = scmp.ne.s32.totalorder %s181, %s182
      %p193 = scmp.eq.s32.totalorder %s21, 0
      %p194 = por %p192, %p193
      %p195 = scmp.ne.s32.totalorder %s181, %s182
      %p196 = scmp.eq.s32.totalorder %s22, 1
      %p197 = por %p195, %p196
      %p199 = scmp.ne.s32.totalorder %s182, %s198
      %p200 = scmp.eq.s32.totalorder %s22, 0
      %p201 = por %p199, %p200
      %p202 = scmp.le.s32.totalorder 1, %s16
      %p203 = scmp.lt.s32.totalorder %s16, 3
      %p204 = pnand %p202, %p203
      %p205 = pneg %p204
      // Predicated region
      $region9: #{patch_embed_forward.1} parent=5 // pred_check
        _
      $region10: #{patch_embed_forward.1} parent=5 // pred_check_branch
        %207 = sbr.rel (%p204) target = $region12
      $region11: #{patch_embed_forward.1} parent=5 // pred_region
        %s208 = ssub.s32 %s16, 1
        // Predicated region
        $region13: #{patch_embed_forward.1} parent=11 // pred_check
          %p209 = pneg %p63
        $region14: #{patch_embed_forward.1} parent=11 // pred_check_branch
          %211 = sbr.rel (%p209) target = $region16
        $region15: #{patch_embed_forward.1} parent=11 // pred_region
          _
        $region16: #{patch_embed_forward.1} parent=11 // pred_fallthru
          _
        // Predicated region
        $region17: #{patch_embed_forward.1} parent=11 // pred_check
          %p212 = pneg %p84
        $region18: #{patch_embed_forward.1} parent=11 // pred_check_branch
          %214 = sbr.rel (%p212) target = $region20
        $region19: #{patch_embed_forward.1} parent=11 // pred_region
          _
        $region20: #{patch_embed_forward.1} parent=11 // pred_fallthru
          _
        // Predicated region
        $region21: #{patch_embed_forward.1} parent=11 // pred_check
          %p215 = pneg %p105
        $region22: #{patch_embed_forward.1} parent=11 // pred_check_branch
          %217 = sbr.rel (%p215) target = $region24
        $region23: #{patch_embed_forward.1} parent=11 // pred_region
          _
        $region24: #{patch_embed_forward.1} parent=11 // pred_fallthru
          _
        // Predicated region
        $region25: #{patch_embed_forward.1} parent=11 // pred_check
          %p218 = pneg %p126
        $region26: #{patch_embed_forward.1} parent=11 // pred_check_branch
          %220 = sbr.rel (%p218) target = $region28
        $region27: #{patch_embed_forward.1} parent=11 // pred_region
          _
        $region28: #{patch_embed_forward.1} parent=11 // pred_fallthru
          _
        // Predicated region
        $region29: #{patch_embed_forward.1} parent=11 // pred_check
          %p221 = pneg %p147
        $region30: #{patch_embed_forward.1} parent=11 // pred_check_branch
          %223 = sbr.rel (%p221) target = $region32
        $region31: #{patch_embed_forward.1} parent=11 // pred_region
          _
        $region32: #{patch_embed_forward.1} parent=11 // pred_fallthru
          _
        // Predicated region
        $region33: #{patch_embed_forward.1} parent=11 // pred_check
          %p224 = pneg %p168
        $region34: #{patch_embed_forward.1} parent=11 // pred_check_branch
          %226 = sbr.rel (%p224) target = $region36
        $region35: #{patch_embed_forward.1} parent=11 // pred_region
          _
        $region36: #{patch_embed_forward.1} parent=11 // pred_fallthru
          _
      $region12: #{patch_embed_forward.1} parent=5 // pred_fallthru
        _
      %p227 = scmp.lt.s32.totalorder %s16, 2
      // Predicated region
      $region37: #{patch_embed_forward.1} parent=5 // pred_check
        %p228 = pneg %p227
      $region38: #{patch_embed_forward.1} parent=5 // pred_check_branch
        %230 = sbr.rel (%p228) target = $region40
      $region39: #{patch_embed_forward.1} parent=5 // pred_region
        // Predicated region
        $region41: #{patch_embed_forward.1} parent=39 // pred_check
          %p231 = pneg %p36
        $region42: #{patch_embed_forward.1} parent=39 // pred_check_branch
          %233 = sbr.rel (%p231) target = $region44
        $region43: #{patch_embed_forward.1} parent=39 // pred_region
          %p234 = scmp.lt.s32.totalorder %s16, 1
          %s235 = scalar_select %p234, %s16, 1
          %s236 = smul.addr %s235, 2
          %s237 = smul.addr %s236, 4
          %s238 = scalar_lea.vmem %s0, %s237
        $region44: #{patch_embed_forward.1} parent=39 // pred_fallthru
          _
      $region40: #{patch_embed_forward.1} parent=5 // pred_fallthru
        _
      %p239 = scmp.le.s32.totalorder 1, %s16
      %p240 = scmp.lt.s32.totalorder %s16, 3
      %p241 = pnand %p239, %p240
      %p242 = pneg %p241
      // Predicated region
      $region45: #{patch_embed_forward.1} parent=5 // pred_check
        _
      $region46: #{patch_embed_forward.1} parent=5 // pred_check_branch
        %244 = sbr.rel (%p241) target = $region48
      $region47: #{patch_embed_forward.1} parent=5 // pred_region
        %s245 = ssub.s32 %s16, 1
        %p246 = scmp.lt.s32.totalorder %s21, 1
        %s247 = scalar_select %p246, %s21, 1
        %s248 = smul.addr %s247, 2
        %s249 = smul.addr %s248, 4
        %s250 = scalar_lea.vmem %s0, %s249
        %p251 = pneg %p42
        %p252 = pneg %p39
        %p253 = pneg %p63
        %p254 = pneg %p60
        %p255 = pneg %p84
        %p256 = pneg %p81
        %p257 = pneg %p105
        %p258 = pneg %p102
        %p259 = pneg %p126
        %p260 = pneg %p123
        %p261 = pneg %p147
        %p262 = pneg %p144
        %p263 = pneg %p168
        %p264 = pneg %p165
        %p265 = pneg %p194
        %p266 = pneg %p191
        %s267 = sand.u32 %s181, 1
        %s268 = scalar_lea.sflag [#allocation4], %s267
        %s269 = sand.u32 %s181, 1
        %s270 = smul.addr %s269, 16
        %s271 = scalar_lea.vmem [#allocation3], %s270
        %p272 = scmp.lt.s32.totalorder %s21, 1
        %s273 = scalar_select %p272, %s21, 1
        %s274 = smul.addr %s273, 2
        %s275 = smul.addr %s274, 4
        %s276 = scalar_lea.vmem %s0, %s275
        %277 = vst [vmem:[#allocation2] sm:$0xff] 0.0
        %s278 = scalar_lea.vmem [#allocation2], 40
        %279 = vst [vmem:[%s278] sm:$0xff] 0.0
        %s280 = scalar_lea.vmem [#allocation2], 8
        %281 = vst [vmem:[%s280] sm:$0x1] 0.0
        %282 = vst [vmem:[%s280 + $0x8] sm:$0x1] 0.0
        %283 = vst [vmem:[%s280 + $0x10] sm:$0x1] 0.0
        %284 = vst [vmem:[%s280 + $0x18] sm:$0x1] 0.0
        %285 = vst [vmem:[%s280 + $0x5] sm:$0x1] 0.0
        %286 = vst [vmem:[%s280 + $0xd] sm:$0x1] 0.0
        %287 = vst [vmem:[%s280 + $0x15] sm:$0x1] 0.0
        %288 = vst [vmem:[%s280 + $0x1d] sm:$0x1] 0.0
        %v289 = vld [vmem:[%s276] sm:$0xf]
        %v290 = vld [vmem:[%s276 + $0x4] sm:$0xf]
        %v291 = vld [vmem:[%s1] sm:$0xf]
        %v292 = vld [vmem:[%s1 + $0x4] sm:$0xf]
        %v293 = vld [vmem:[%s1 + $0x8] sm:$0xf]
        %v294 = vld [vmem:[%s1 + $0xc] sm:$0xf]
        %v295 = vld [vmem:[%s1 + $0x10] sm:$0xf]
        %v296 = vld [vmem:[%s1 + $0x14] sm:$0xf]
        %v297 = vld [vmem:[%s1 + $0x18] sm:$0xf]
        %v298 = vld [vmem:[%s1 + $0x1c] sm:$0xf]
        %v299 = vld [vmem:[%s1 + $0x20] sm:$0xf]
        %v300 = vld [vmem:[%s1 + $0x24] sm:$0xf]
        %v301 = vld [vmem:[%s1 + $0x28] sm:$0xf]
        %v302 = vld [vmem:[%s1 + $0x2c] sm:$0xf]
        %v303 = vld [vmem:[%s1 + $0x30] sm:$0xf]
        %v304 = vld [vmem:[%s1 + $0x34] sm:$0xf]
        %v305 = vld [vmem:[%s1 + $0x38] sm:$0xf]
        %v306 = vld [vmem:[%s1 + $0x3c] sm:$0xf]
        %v307 = vld [vmem:[%s2] sm:$0x1]
        %v309 = vperm.slane %v307, 0
        %v313 = vunpack.c.l.b16 %v289
        %v314 = vunpack.c.l.b16 %v290
        %v315 = vpack.c.b16 %v314, %v313
        %v333 = vunpack.c.l.b16 %v291
        %v334 = vunpack.c.l.b16 %v292
        %v335 = vunpack.c.l.b16 %v293
        %v336 = vunpack.c.l.b16 %v294
        %v337 = vunpack.c.l.b16 %v295
        %v338 = vunpack.c.l.b16 %v296
        %v339 = vunpack.c.l.b16 %v297
        %v340 = vunpack.c.l.b16 %v298
        %v341 = vunpack.c.l.b16 %v299
        %v342 = vunpack.c.l.b16 %v300
        %v343 = vunpack.c.l.b16 %v301
        %v344 = vunpack.c.l.b16 %v302
        %v345 = vunpack.c.l.b16 %v303
        %v346 = vunpack.c.l.b16 %v304
        %v347 = vunpack.c.l.b16 %v305
        %v348 = vunpack.c.l.b16 %v306
        %v349 = vpack.c.b16 %v334, %v333
        %v350 = vpack.c.b16 %v336, %v335
        %v351 = vpack.c.b16 %v338, %v337
        %v352 = vpack.c.b16 %v340, %v339
        %v353 = vpack.c.b16 %v342, %v341
        %v354 = vpack.c.b16 %v344, %v343
        %v355 = vpack.c.b16 %v346, %v345
        %v356 = vpack.c.b16 %v348, %v347
        %365 = vmatpush.bf16.msra.mxu0 %v356
        %366 = vmatpush.bf16.msra.mxu0 %v355
        %367 = vmatpush.bf16.msra.mxu0 %v354
        %368 = vmatpush.bf16.msra.mxu0 %v353
        %369 = vmatpush.bf16.msra.mxu0 %v352
        %370 = vmatpush.bf16.msra.mxu0 %v351
        %371 = vmatpush.bf16.msra.mxu0 %v350
        %372 = vmatpush.bf16.msra.mxu0 %v349
        %373 = vmatmul.bf16.gmra.mxu0 %v315
        %v374 = vpop.f32.mrf.mxu0
        %v375 = vadd.f32 %v309, %v374
        %v376 = vpop.f32.mrf.mxu0
        %v377 = vadd.f32 %v309, %v376
        %378 = vdwg.mxu0
        %v381 = vrot.slane %v375, 4
        %v382 = vrot.slane %v377, 4
        %385 = vst [vmem:[%s280 + $0x1] sm:$0xf] %v375
        %386 = vst [vmem:[%s280 + $0x9] sm:$0xf] %v381
        %387 = vst [vmem:[%s280 + $0x11] sm:$0xf] %v377
        %388 = vst [vmem:[%s280 + $0x19] sm:$0xf] %v382
        %v389 = vld [vmem:[#allocation2] sm:$0xf]
        %v390 = vld [vmem:[#allocation2 + $0x8] sm:$0xf]
        %v391 = vld [vmem:[#allocation2 + $0x10] sm:$0xf]
        %v392 = vld [vmem:[#allocation2 + $0x18] sm:$0xf]
        %v393 = vld [vmem:[%s3] sm:$0x1]
        %v395 = vperm.slane %v393, 0
        %v397 = vmul.f32 %v389, %v395
        %v398 = vmul.f32 %v390, %v395
        %v399 = vmul.f32 %v391, %v395
        %v400 = vmul.f32 %v392, %v395
        %v401 = vld [vmem:[#allocation2 + $0x1] sm:$0xf]
        %v402 = vld [vmem:[#allocation2 + $0x9] sm:$0xf]
        %v403 = vld [vmem:[#allocation2 + $0x11] sm:$0xf]
        %v404 = vld [vmem:[#allocation2 + $0x19] sm:$0xf]
        %s405 = scalar_lea.vmem %s3, 1
        %v406 = vld [vmem:[%s405] sm:$0x1]
        %v408 = vperm.slane %v406, 0
        %v410 = vmul.f32 %v401, %v408
        %v411 = vmul.f32 %v402, %v408
        %v412 = vmul.f32 %v403, %v408
        %v413 = vmul.f32 %v404, %v408
        %v414 = vadd.f32 %v397, %v410
        %v415 = vadd.f32 %v398, %v411
        %v416 = vadd.f32 %v399, %v412
        %v417 = vadd.f32 %v400, %v413
        %v418 = vld [vmem:[#allocation2 + $0x2] sm:$0xf]
        %v419 = vld [vmem:[#allocation2 + $0xa] sm:$0xf]
        %v420 = vld [vmem:[#allocation2 + $0x12] sm:$0xf]
        %v421 = vld [vmem:[#allocation2 + $0x1a] sm:$0xf]
        %s422 = scalar_lea.vmem %s3, 2
        %v423 = vld [vmem:[%s422] sm:$0x1]
        %v425 = vperm.slane %v423, 0
        %v427 = vmul.f32 %v418, %v425
        %v428 = vmul.f32 %v419, %v425
        %v429 = vmul.f32 %v420, %v425
        %v430 = vmul.f32 %v421, %v425
        %v431 = vadd.f32 %v414, %v427
        %v432 = vadd.f32 %v415, %v428
        %v433 = vadd.f32 %v416, %v429
        %v434 = vadd.f32 %v417, %v430
        %v435 = vld [vmem:[%s280] sm:$0xf]
        %v436 = vld [vmem:[%s280 + $0x8] sm:$0xf]
        %v437 = vld [vmem:[%s280 + $0x10] sm:$0xf]
        %v438 = vld [vmem:[%s280 + $0x18] sm:$0xf]
        %s439 = scalar_lea.vmem %s3, 3
        %v440 = vld [vmem:[%s439] sm:$0x1]
        %v442 = vperm.slane %v440, 0
        %v444 = vmul.f32 %v435, %v442
        %v445 = vmul.f32 %v436, %v442
        %v446 = vmul.f32 %v437, %v442
        %v447 = vmul.f32 %v438, %v442
        %v448 = vadd.f32 %v431, %v444
        %v449 = vadd.f32 %v432, %v445
        %v450 = vadd.f32 %v433, %v446
        %v451 = vadd.f32 %v434, %v447
        %v452 = vld [vmem:[%s280 + $0x1] sm:$0xf]
        %v453 = vld [vmem:[%s280 + $0x9] sm:$0xf]
        %v454 = vld [vmem:[%s280 + $0x11] sm:$0xf]
        %v455 = vld [vmem:[%s280 + $0x19] sm:$0xf]
        %s456 = scalar_lea.vmem %s3, 4
        %v457 = vld [vmem:[%s456] sm:$0x1]
        %v459 = vperm.slane %v457, 0
        %v461 = vmul.f32 %v452, %v459
        %v462 = vmul.f32 %v453, %v459
        %v463 = vmul.f32 %v454, %v459
        %v464 = vmul.f32 %v455, %v459
        %v465 = vadd.f32 %v448, %v461
        %v466 = vadd.f32 %v449, %v462
        %v467 = vadd.f32 %v450, %v463
        %v468 = vadd.f32 %v451, %v464
        %v469 = vld [vmem:[%s280 + $0x2] sm:$0xf]
        %v470 = vld [vmem:[%s280 + $0xa] sm:$0xf]
        %v471 = vld [vmem:[%s280 + $0x12] sm:$0xf]
        %v472 = vld [vmem:[%s280 + $0x1a] sm:$0xf]
        %s473 = scalar_lea.vmem %s3, 5
        %v474 = vld [vmem:[%s473] sm:$0x1]
        %v476 = vperm.slane %v474, 0
        %v478 = vmul.f32 %v469, %v476
        %v479 = vmul.f32 %v470, %v476
        %v480 = vmul.f32 %v471, %v476
        %v481 = vmul.f32 %v472, %v476
        %v482 = vadd.f32 %v465, %v478
        %v483 = vadd.f32 %v466, %v479
        %v484 = vadd.f32 %v467, %v480
        %v485 = vadd.f32 %v468, %v481
        %s486 = scalar_lea.vmem [#allocation2], 16
        %v487 = vld [vmem:[%s486] sm:$0xf]
        %v488 = vld [vmem:[%s486 + $0x8] sm:$0xf]
        %v489 = vld [vmem:[%s486 + $0x10] sm:$0xf]
        %v490 = vld [vmem:[%s486 + $0x18] sm:$0xf]
        %s491 = scalar_lea.vmem %s3, 6
        %v492 = vld [vmem:[%s491] sm:$0x1]
        %v494 = vperm.slane %v492, 0
        %v496 = vmul.f32 %v487, %v494
        %v497 = vmul.f32 %v488, %v494
        %v498 = vmul.f32 %v489, %v494
        %v499 = vmul.f32 %v490, %v494
        %v500 = vadd.f32 %v482, %v496
        %v501 = vadd.f32 %v483, %v497
        %v502 = vadd.f32 %v484, %v498
        %v503 = vadd.f32 %v485, %v499
        %v504 = vld [vmem:[%s486 + $0x1] sm:$0xf]
        %v505 = vld [vmem:[%s486 + $0x9] sm:$0xf]
        %v506 = vld [vmem:[%s486 + $0x11] sm:$0xf]
        %v507 = vld [vmem:[%s486 + $0x19] sm:$0xf]
        %s508 = scalar_lea.vmem %s3, 7
        %v509 = vld [vmem:[%s508] sm:$0x1]
        %v511 = vperm.slane %v509, 0
        %v513 = vmul.f32 %v504, %v511
        %v514 = vmul.f32 %v505, %v511
        %v515 = vmul.f32 %v506, %v511
        %v516 = vmul.f32 %v507, %v511
        %v517 = vadd.f32 %v500, %v513
        %v518 = vadd.f32 %v501, %v514
        %v519 = vadd.f32 %v502, %v515
        %v520 = vadd.f32 %v503, %v516
        %v521 = vld [vmem:[%s486 + $0x2] sm:$0xf]
        %v522 = vld [vmem:[%s486 + $0xa] sm:$0xf]
        %v523 = vld [vmem:[%s486 + $0x12] sm:$0xf]
        %v524 = vld [vmem:[%s486 + $0x1a] sm:$0xf]
        %s525 = scalar_lea.vmem %s3, 8
        %v526 = vld [vmem:[%s525] sm:$0x1]
        %v528 = vperm.slane %v526, 0
        %v530 = vmul.f32 %v521, %v528
        %v531 = vmul.f32 %v522, %v528
        %v532 = vmul.f32 %v523, %v528
        %v533 = vmul.f32 %v524, %v528
        %v534 = vadd.f32 %v517, %v530
        %v535 = vadd.f32 %v518, %v531
        %v536 = vadd.f32 %v519, %v532
        %v537 = vadd.f32 %v520, %v533
        %v538 = vld [vmem:[%s4] sm:$0x1]
        %v540 = vperm.slane %v538, 0
        %v542 = vrot.slane %v540, 4
        %v544 = vadd.f32 %v534, %v540
        %v545 = vadd.f32 %v535, %v542
        %v546 = vadd.f32 %v536, %v540
        %v547 = vadd.f32 %v537, %v542
        %v548 = vsub.f32 0.0, %v544
        %v549 = vsub.f32 0.0, %v545
        %v550 = vsub.f32 0.0, %v546
        %v551 = vsub.f32 0.0, %v547
        %v552 = vmul.f32 %v548, 1.442695
        %v553 = vpow.pop %v552
        %v554 = vmul.f32 %v549, 1.442695
        %v555 = vpow.pop %v554
        %v556 = vmul.f32 %v550, 1.442695
        %v557 = vpow.pop %v556
        %v558 = vmul.f32 %v551, 1.442695
        %v559 = vpow.pop %v558
        %v560 = vadd.f32 %v553, 1.0
        %v561 = vadd.f32 %v555, 1.0
        %v562 = vadd.f32 %v557, 1.0
        %v563 = vadd.f32 %v559, 1.0
        %v564 = vrcp.pop %v560
        %v565 = vmul.f32 %v560, %v564
        %v566 = vsub.f32 1.0, %v565
        %v567 = vmul.f32 %v564, %v566
        %v568 = vadd.f32 %v564, %v567
        %vm569 = vweird.f32 %v560
        %vm570 = vweird.f32 %v564
        %vm571 = vmor %vm569, %vm570
        %v572 = vsel %vm571, %v564, %v568
        %v573 = vand.u32 2147483647, %v560
        %vm574 = vcmp.eq.f32.partialorder %v573, 8.507059e+37
        %v575 = vand.u32 %v560, 2147483648
        %v576 = vor.u32 1.1754944e-38, %v575
        %v577 = vsel %vm574, %v576, %v572
        %v578 = vmul.f32 1.0, %v577
        %v579 = vrcp.pop %v561
        %v580 = vmul.f32 %v561, %v579
        %v581 = vsub.f32 1.0, %v580
        %v582 = vmul.f32 %v579, %v581
        %v583 = vadd.f32 %v579, %v582
        %vm584 = vweird.f32 %v561
        %vm585 = vweird.f32 %v579
        %vm586 = vmor %vm584, %vm585
        %v587 = vsel %vm586, %v579, %v583
        %v588 = vand.u32 2147483647, %v561
        %vm589 = vcmp.eq.f32.partialorder %v588, 8.507059e+37
        %v590 = vand.u32 %v561, 2147483648
        %v591 = vor.u32 1.1754944e-38, %v590
        %v592 = vsel %vm589, %v591, %v587
        %v593 = vmul.f32 1.0, %v592
        %v594 = vrcp.pop %v562
        %v595 = vmul.f32 %v562, %v594
        %v596 = vsub.f32 1.0, %v595
        %v597 = vmul.f32 %v594, %v596
        %v598 = vadd.f32 %v594, %v597
        %vm599 = vweird.f32 %v562
        %vm600 = vweird.f32 %v594
        %vm601 = vmor %vm599, %vm600
        %v602 = vsel %vm601, %v594, %v598
        %v603 = vand.u32 2147483647, %v562
        %vm604 = vcmp.eq.f32.partialorder %v603, 8.507059e+37
        %v605 = vand.u32 %v562, 2147483648
        %v606 = vor.u32 1.1754944e-38, %v605
        %v607 = vsel %vm604, %v606, %v602
        %v608 = vmul.f32 1.0, %v607
        %v609 = vrcp.pop %v563
        %v610 = vmul.f32 %v563, %v609
        %v611 = vsub.f32 1.0, %v610
        %v612 = vmul.f32 %v609, %v611
        %v613 = vadd.f32 %v609, %v612
        %vm614 = vweird.f32 %v563
        %vm615 = vweird.f32 %v609
        %vm616 = vmor %vm614, %vm615
        %v617 = vsel %vm616, %v609, %v613
        %v618 = vand.u32 2147483647, %v563
        %vm619 = vcmp.eq.f32.partialorder %v618, 8.507059e+37
        %v620 = vand.u32 %v563, 2147483648
        %v621 = vor.u32 1.1754944e-38, %v620
        %v622 = vsel %vm619, %v621, %v617
        %v623 = vmul.f32 1.0, %v622
        %628 = vst [vmem:[#allocation1] ss:$2 sm:$0xff] %v578
        %s629 = scalar_lea.vmem [#allocation1], 1
        %630 = vst [vmem:[%s629] ss:$2 sm:$0xff] %v593
        %s631 = scalar_lea.vmem [#allocation1], 16
        %632 = vst [vmem:[%s631] ss:$2 sm:$0xff] %v608
        %s633 = scalar_lea.vmem [#allocation1], 17
        %634 = vst [vmem:[%s633] ss:$2 sm:$0xff] %v623
        %v635 = vld.sshfl [vmem:[#allocation1] sm:$0xff pattern:$0x75316420]
        %v636 = vld.sshfl [vmem:[#allocation1 + $0x10] sm:$0xff pattern:$0x75316420]
        %v639 = vmul.f32 %v375, %v635
        %v640 = vmul.f32 %v377, %v636
        %v641 = vlaneseq
        %v642 = vand.u32 %v641, 127
        %vm643 = vcmp.lt.s32.totalorder %v642, 32
        %644 = vadd.xlane.f32.xlu0 %v639
        %v645 = vpop.xlane.xlu0 %644
        %646 = vadd.xlane.f32.xlu0 %v640
        %v647 = vpop.xlane.xlu0 %646
        %v648 = vmul.f32 %v645, 0.03125
        %v649 = vmul.f32 %v647, 0.03125
        %v650 = vsub.f32 %v639, %v648
        %v651 = vsub.f32 %v640, %v649
        %v652 = vsel %vm643, 1, 0
        %vm653 = vcmp.eq.s32.totalorder %v652, 1
        %v654 = vsel %vm653, %v650, 0.0
        %v655 = vsel %vm653, %v651, 0.0
        %v656 = vmul.f32 %v654, %v654
        %v657 = vmul.f32 %v655, %v655
        %658 = vadd.xlane.f32.xlu0 %v656
        %v659 = vpop.xlane.xlu0 %658
        %660 = vadd.xlane.f32.xlu0 %v657
        %v661 = vpop.xlane.xlu0 %660
        %v662 = vmul.f32 %v659, 0.03125
        %v663 = vmul.f32 %v661, 0.03125
        %v664 = vadd.f32 %v662, 1e-06
        %v665 = vadd.f32 %v663, 1e-06
        %v666 = vrsqrt.pop %v664
        %v667 = vmul.f32 %v666, %v664
        %v668 = vmul.f32 %v667, %v666
        %v669 = vmul.f32 0.5, %v668
        %v670 = vsub.f32 1.5, %v669
        %v671 = vmul.f32 %v666, %v670
        %vm672 = vweird.f32 %v664
        %vm673 = vweird.f32 %v666
        %vm674 = vmor %vm672, %vm673
        %v675 = vsel %vm674, %v666, %v671
        %v676 = vrsqrt.pop %v665
        %v677 = vmul.f32 %v676, %v665
        %v678 = vmul.f32 %v677, %v676
        %v679 = vmul.f32 0.5, %v678
        %v680 = vsub.f32 1.5, %v679
        %v681 = vmul.f32 %v676, %v680
        %vm682 = vweird.f32 %v665
        %vm683 = vweird.f32 %v676
        %vm684 = vmor %vm682, %vm683
        %v685 = vsel %vm684, %v676, %v681
        %v686 = vmul.f32 %v654, %v675
        %v687 = vmul.f32 %v655, %v685
        %v688 = vld [vmem:[%s5] sm:$0x1]
        %v690 = vperm.slane %v688, 0
        %v692 = vmul.f32 %v686, %v690
        %v693 = vmul.f32 %v687, %v690
        %v694 = vld [vmem:[%s6] sm:$0x1]
        %v696 = vperm.slane %v694, 0
        %v698 = vadd.f32 %v692, %v696
        %v699 = vadd.f32 %v693, %v696
        %700 = vst [vmem:[%s271] sm:$0xff] %v698
        %701 = vst [vmem:[%s271 + $0x8] sm:$0xff] %v699
        %s702 = sand.u32 %s181, 1
        %s703 = scalar_lea.sflag [#allocation4], %s702
        %s704 = sand.u32 %s181, 1
        %s705 = smul.addr %s704, 16
        %s706 = scalar_lea.vmem [#allocation3], %s705
        // Predicated region
        $region49: #{patch_embed_forward.1} parent=47 // pred_check
          %p707 = pneg %p191
        $region50: #{patch_embed_forward.1} parent=47 // pred_check_branch
          %709 = sbr.rel (%p707) target = $region52
        $region51: #{patch_embed_forward.1} parent=47 // pred_region
          %711 = vsyncadd %s703, 0
          %s712 = smul.addr %s21, 2
          %s713 = smul.addr %s712, 8
          %s714 = scalar_lea.hbm %s7, %s713
          %s715 = sshll.u32 %s706, 4
          %s716 = int_to_ptr.vmem [resolvable:$true] %s715
          %s717 = sshll.u32 %s714, 4
          %s718 = int_to_ptr.hbm [resolvable:$true] %s717
          %723 = dma.vmem_to_hbm [thread:$0]  %s716, 256, %s718, %s703, 128, 128, 8
        $region52: #{patch_embed_forward.1} parent=47 // pred_fallthru
          _
      $region48: #{patch_embed_forward.1} parent=5 // pred_fallthru
        _
      %p724 = scmp.le.s32.totalorder 2, %s16
      // Predicated region
      $region53: #{patch_embed_forward.1} parent=5 // pred_check
        %p725 = pneg %p724
      $region54: #{patch_embed_forward.1} parent=5 // pred_check_branch
        %727 = sbr.rel (%p725) target = $region56
      $region55: #{patch_embed_forward.1} parent=5 // pred_region
        %s728 = ssub.s32 %s16, 2
        // Predicated region
        $region57: #{patch_embed_forward.1} parent=55 // pred_check
          %p729 = pneg %p197
        $region58: #{patch_embed_forward.1} parent=55 // pred_check_branch
          %731 = sbr.rel (%p729) target = $region60
        $region59: #{patch_embed_forward.1} parent=55 // pred_region
          %s732 = sand.u32 %s182, 1
          %s733 = scalar_lea.sflag [#allocation4], %s732
          %s734 = sand.u32 %s182, 1
          %s735 = smul.addr %s734, 16
          %s736 = scalar_lea.vmem [#allocation3], %s735
          %738 = dma.done %s733, 256
        $region60: #{patch_embed_forward.1} parent=55 // pred_fallthru
          _
      $region56: #{patch_embed_forward.1} parent=5 // pred_fallthru
        _
    $region6: #{patch_embed_forward.1} parent=1 // loop_footer
      %s20 = sadd.s32 1, %s16
    $region7: #{patch_embed_forward.1} parent=1 // loop_footer_branch
      %15 = sbr.rel target = $region3
    $region8: #{patch_embed_forward.1} parent=1 // loop_exit
      _
    %739 = vsyncpa [#allocation4], 1
    %s740 = scalar_lea.sflag [#allocation4], 1
    %741 = vsyncpa %s740, 1

</llo_original>
